<compile_context>
chip_gen: v7x
topology: tpu7x:2x2x1
jax: 0.10.0
libtpu: 0.0.40
codegen_flags: <defaults>
</compile_context>

<pallas_src>
import math
import jax
import jax.numpy as jnp
from jax import lax
from jax.experimental import pallas as pl
from jax.experimental.pallas import tpu as pltpu


def _round_up(x, m):
    return ((x + m - 1) // m) * m


def _mlp_kernel(x_ref, w1_ref, b1_ref, w2_ref, b2_ref, o_ref, acc_ref):
    k = pl.program_id(1)

    @pl.when(k == 0)
    def _():
        acc_ref[...] = jnp.zeros_like(acc_ref)

    # fc1 chunk: [tm, D](bf16) @ [D, th](bf16) -> f32
    h = jnp.dot(x_ref[...], w1_ref[...], preferred_element_type=jnp.float32)
    h = h + b1_ref[...]                     # bias in f32
    # exact GELU (erf formulation, matches torch.nn.GELU default)
    h = 0.5 * h * (1.0 + lax.erf(h * (1.0 / math.sqrt(2.0))))
    # drop1: p=0.0 -> identity
    # fc2 chunk: accumulate [tm, th](bf16) @ [th, D](bf16) into f32 scratch
    acc_ref[...] += jnp.dot(h.astype(jnp.bfloat16), w2_ref[...],
                            preferred_element_type=jnp.float32)

    @pl.when(k == pl.num_programs(1) - 1)
    def _():
        # drop2: p=0.0 -> identity
        o_ref[...] = (acc_ref[...] + b2_ref[...]).astype(o_ref.dtype)


def _pick_h_chunk(H, target=512):
    # Chunk H only when it divides cleanly into lane-dense (multiple-of-128)
    # pieces; otherwise keep the full H (still correct, just more resident).
    if H > target and H % target == 0:
        return target
    return H


def mlp_pallas(x, w1, b1, w2, b2, *, tm=256, h_chunk=512):
    """x: [B, N, D]; w1: [D, H]; b1: [H]; w2: [H, D]; b2: [D] -> [B, N, D]."""
    B, N, D = x.shape
    H = w1.shape[1]
    M = B * N

    # Row tile: large (MXU-filling) by default, multiple of 16 (bf16 sublanes),
    # clamped so tiny inputs don't over-pad.
    tm_eff = min(tm, _round_up(M, 16))
    M_pad = _round_up(M, tm_eff)

    th = _pick_h_chunk(H, h_chunk)

    # bf16 MXU operands, f32 accumulation inside the kernel.
    x2 = x.reshape(M, D).astype(jnp.bfloat16)
    if M_pad != M:
        x2 = jnp.pad(x2, ((0, M_pad - M), (0, 0)))
    w1b = w1.astype(jnp.bfloat16)
    w2b = w2.astype(jnp.bfloat16)
    b1_2 = b1.reshape(1, H).astype(jnp.float32)
    b2_2 = b2.reshape(1, D).astype(jnp.float32)

    # VMEM budget: double-buffered tiles + weight chunks + accumulator scratch.
    BF16, F32 = 2, 4
    needed = (2 * tm_eff * D * BF16        # x tiles
              + 2 * D * th * BF16          # W1 chunk
              + 2 * th * F32               # b1 chunk
              + 2 * th * D * BF16          # W2 chunk
              + 2 * D * F32                # b2
              + 2 * tm_eff * D * x.dtype.itemsize   # out tiles
              + tm_eff * D * F32)          # accumulator
    vmem_limit = int(min(max(needed + (4 << 20), 32 << 20), 64 << 20))

    grid = (M_pad // tm_eff, H // th)

    # TODO(synk): for production feature sizes, pad D to a multiple of 128 so
    # output stores are lane-dense (test D=32 only fills 32 of 128 lanes).
    out2 = pl.pallas_call(
        _mlp_kernel,
        out_shape=jax.ShapeDtypeStruct((M_pad, D), x.dtype),
        grid_spec=pltpu.PrefetchScalarGridSpec(
            num_scalar_prefetch=0,
            grid=grid,
            in_specs=[
                pl.BlockSpec((tm_eff, D), lambda i, k: (i, 0)),  # x rows (resident over k)
                pl.BlockSpec((D, th), lambda i, k: (0, k)),      # W1 H-chunk
                pl.BlockSpec((1, th), lambda i, k: (0, k)),      # b1 H-chunk
                pl.BlockSpec((th, D), lambda i, k: (k, 0)),      # W2 H-chunk
                pl.BlockSpec((1, D), lambda i, k: (0, 0)),       # b2
            ],
            out_specs=pl.BlockSpec((tm_eff, D), lambda i, k: (i, 0)),
            scratch_shapes=[pltpu.VMEM((tm_eff, D), jnp.float32)],
        ),
        compiler_params=pltpu.CompilerParams(
            dimension_semantics=("parallel", "arbitrary"),
            vmem_limit_bytes=vmem_limit,
        ),
    )(x2, w1b, b1_2, w2b, b2_2)

    return out2[:M].reshape(B, N, D)


def mlp_reference(x, w1, b1, w2, b2):
    h = jnp.einsum("bnd,dh->bnh", x, w1) + b1
    h = 0.5 * h * (1.0 + lax.erf(h / jnp.sqrt(2.0).astype(h.dtype)))
    return jnp.einsum("bnh,hd->bnd", h, w2) + b2


if __name__ == "__main__":
    # Small shapes: batch=2, seq=8, in_features=32, hidden_features=64
    B, N, D, H = 2, 8, 32, 64

    key = jax.random.PRNGKey(0)
    kx, k1, k2, k3, k4 = jax.random.split(key, 5)

    x = jax.random.normal(kx, (B, N, D), dtype=jnp.float32)

    # Deterministic PyTorch-Linear-style init: U(-1/sqrt(fan_in), 1/sqrt(fan_in))
    lim1 = 1.0 / math.sqrt(D)
    lim2 = 1.0 / math.sqrt(H)
    w1 = jax.random.uniform(k1, (D, H), jnp.float32, -lim1, lim1)
    b1 = jax.random.uniform(k2, (H,),  jnp.float32, -lim1, lim1)
    w2 = jax.random.uniform(k3, (H, D), jnp.float32, -lim2, lim2)
    b2 = jax.random.uniform(k4, (D,),  jnp.float32, -lim2, lim2)

    out = mlp_pallas(x, w1, b1, w2, b2)
    out = jax.block_until_ready(out)

    ref = mlp_reference(x, w1, b1, w2, b2)
    assert out.shape == (B, N, D)
    # bf16 MXU operands (f32 accumulation) => relaxed tolerance vs f32 reference.
    assert jnp.allclose(out, ref, atol=2e-2, rtol=2e-2), "mismatch vs reference"

    print("KERNEL_OK")
</pallas_src>

<mosaic_0001>
module attributes {stable_mosaic.version = 11 : i64} {
  func.func @_mlp_kernel(%arg0: i32, %arg1: i32, %arg2: memref<16x32xbf16, #tpu.memory_space<vmem>>, %arg3: memref<32x64xbf16, #tpu.memory_space<vmem>>, %arg4: memref<1x64xf32, #tpu.memory_space<vmem>>, %arg5: memref<64x32xbf16, #tpu.memory_space<vmem>>, %arg6: memref<1x32xf32, #tpu.memory_space<vmem>>, %arg7: memref<16x32xf32, #tpu.memory_space<vmem>>, %arg8: memref<16x32xf32, #tpu.memory_space<vmem>>) attributes {dimension_semantics = [#tpu.dimension_semantics<parallel>, #tpu.dimension_semantics<arbitrary>], iteration_bounds = array<i64: 1, 1>, scalar_prefetch = 0 : i64, scratch_operands = 1 : i64, tpu.core_type = #tpu.core_type<tc>, window_params = [{transform_indices = @transform_0, window_bounds = array<i64: 16, 32>}, {transform_indices = @transform_1, window_bounds = array<i64: 32, 64>}, {transform_indices = @transform_2, window_bounds = array<i64: 1, 64>}, {transform_indices = @transform_3, window_bounds = array<i64: 64, 32>}, {pipeline_mode = #tpu.pipeline_mode<synchronous>, transform_indices = @transform_4, window_bounds = array<i64: 1, 32>}, {transform_indices = @transform_5, window_bounds = array<i64: 16, 32>}]} {
    %c0_i32 = arith.constant 0 : i32
    %0 = arith.cmpi eq, %arg1, %c0_i32 : i32
    %1 = arith.extui %0 : i1 to i32
    %c0_i32_0 = arith.constant 0 : i32
    %2 = arith.cmpi ne, %1, %c0_i32_0 : i32
    scf.if %2 {
      %cst_18 = arith.constant 0.000000e+00 : f32
      %26 = vector.broadcast %cst_18 : f32 to vector<16x32xf32>
      %c0_19 = arith.constant 0 : index
      %c0_20 = arith.constant 0 : index
      %27 = vector.load %arg8[%c0_19, %c0_20] : memref<16x32xf32, #tpu.memory_space<vmem>>, vector<16x32xf32>
      tpu.vector_store %arg8[%c0_19, %c0_20], %26 {strides = array<i32>} : memref<16x32xf32, #tpu.memory_space<vmem>>, vector<16x32xf32>,
    } else {
    }
    %c0 = arith.constant 0 : index
    %c0_1 = arith.constant 0 : index
    %3 = vector.load %arg2[%c0, %c0_1] : memref<16x32xbf16, #tpu.memory_space<vmem>>, vector<16x32xbf16>
    %c0_2 = arith.constant 0 : index
    %c0_3 = arith.constant 0 : index
    %4 = vector.load %arg3[%c0_2, %c0_3] : memref<32x64xbf16, #tpu.memory_space<vmem>>, vector<32x64xbf16>
    %cst = arith.constant dense<0.000000e+00> : vector<16x64xf32>
    %5 = tpu.matmul %3, %4, %cst {dimension_numbers = #tpu.dot_dimension_numbers<[1], [0], [0], [1], [0, 0, 1, 1], [], []>} : vector<16x32xbf16>, vector<32x64xbf16>, vector<16x64xf32> -> vector<16x64xf32>
    %c0_4 = arith.constant 0 : index
    %c0_5 = arith.constant 0 : index
    %6 = vector.load %arg4[%c0_4, %c0_5] : memref<1x64xf32, #tpu.memory_space<vmem>>, vector<1x64xf32>
    %7 = vector.broadcast %6 : vector<1x64xf32> to vector<16x64xf32>
    %8 = arith.addf %5, %7 : vector<16x64xf32>
    %cst_6 = arith.constant 5.000000e-01 : f32
    %9 = vector.broadcast %cst_6 : f32 to vector<16x64xf32>
    %10 = arith.mulf %9, %8 : vector<16x64xf32>
    %cst_7 = arith.constant 0.707106769 : f32
    %11 = vector.broadcast %cst_7 : f32 to vector<16x64xf32>
    %12 = arith.mulf %8, %11 : vector<16x64xf32>
    %13 = math.erf %12 : vector<16x64xf32>
    %cst_8 = arith.constant 1.000000e+00 : f32
    %14 = vector.broadcast %cst_8 : f32 to vector<16x64xf32>
    %15 = arith.addf %14, %13 : vector<16x64xf32>
    %16 = arith.mulf %10, %15 : vector<16x64xf32>
    %c0_9 = arith.constant 0 : index
    %c0_10 = arith.constant 0 : index
    %17 = vector.load %arg8[%c0_9, %c0_10] : memref<16x32xf32, #tpu.memory_space<vmem>>, vector<16x32xf32>
    %18 = arith.truncf %16 : vector<16x64xf32> to vector<16x64xbf16>
    %c0_11 = arith.constant 0 : index
    %c0_12 = arith.constant 0 : index
    %19 = vector.load %arg5[%c0_11, %c0_12] : memref<64x32xbf16, #tpu.memory_space<vmem>>, vector<64x32xbf16>
    %cst_13 = arith.constant dense<0.000000e+00> : vector<16x32xf32>
    %20 = tpu.matmul %18, %19, %cst_13 {dimension_numbers = #tpu.dot_dimension_numbers<[1], [0], [0], [1], [0, 0, 1, 1], [], []>} : vector<16x64xbf16>, vector<64x32xbf16>, vector<16x32xf32> -> vector<16x32xf32>
    %21 = arith.addf %17, %20 : vector<16x32xf32>
    %c0_14 = arith.constant 0 : index
    %c0_15 = arith.constant 0 : index
    %22 = vector.load %arg8[%c0_14, %c0_15] : memref<16x32xf32, #tpu.memory_space<vmem>>, vector<16x32xf32>
    tpu.vector_store %arg8[%c0_14, %c0_15], %21 {strides = array<i32>} : memref<16x32xf32, #tpu.memory_space<vmem>>, vector<16x32xf32>,
    %c0_i32_16 = arith.constant 0 : i32
    %23 = arith.cmpi eq, %arg1, %c0_i32_16 : i32
    %24 = arith.extui %23 : i1 to i32
    %c0_i32_17 = arith.constant 0 : i32
    %25 = arith.cmpi ne, %24, %c0_i32_17 : i32
    scf.if %25 {
      %c0_18 = arith.constant 0 : index
      %c0_19 = arith.constant 0 : index
      %26 = vector.load %arg8[%c0_18, %c0_19] : memref<16x32xf32, #tpu.memory_space<vmem>>, vector<16x32xf32>
      %c0_20 = arith.constant 0 : index
      %c0_21 = arith.constant 0 : index
      %27 = vector.load %arg6[%c0_20, %c0_21] : memref<1x32xf32, #tpu.memory_space<vmem>>, vector<1x32xf32>
      %28 = vector.broadcast %27 : vector<1x32xf32> to vector<16x32xf32>
      %29 = arith.addf %26, %28 : vector<16x32xf32>
      %c0_22 = arith.constant 0 : index
      %c0_23 = arith.constant 0 : index
      %30 = vector.load %arg7[%c0_22, %c0_23] : memref<16x32xf32, #tpu.memory_space<vmem>>, vector<16x32xf32>
      tpu.vector_store %arg7[%c0_22, %c0_23], %29 {strides = array<i32>} : memref<16x32xf32, #tpu.memory_space<vmem>>, vector<16x32xf32>,
    } else {
    }
    return
  }
  func.func @transform_0(%arg0: i32, %arg1: i32) -> (i32, i32) {
    %c0_i32 = arith.constant 0 : i32
    %c0_i32_0 = arith.constant 0 : i32
    return %arg0, %c0_i32 : i32, i32
  }
  func.func @transform_1(%arg0: i32, %arg1: i32) -> (i32, i32) {
    %c0_i32 = arith.constant 0 : i32
    %c0_i32_0 = arith.constant 0 : i32
    return %c0_i32, %arg1 : i32, i32
  }
  func.func @transform_2(%arg0: i32, %arg1: i32) -> (i32, i32) {
    %c0_i32 = arith.constant 0 : i32
    %c0_i32_0 = arith.constant 0 : i32
    return %c0_i32, %arg1 : i32, i32
  }
  func.func @transform_3(%arg0: i32, %arg1: i32) -> (i32, i32) {
    %c0_i32 = arith.constant 0 : i32
    %c0_i32_0 = arith.constant 0 : i32
    return %arg1, %c0_i32 : i32, i32
  }
  func.func @transform_4(%arg0: i32, %arg1: i32) -> (i32, i32) {
    %c0_i32 = arith.constant 0 : i32
    %c0_i32_0 = arith.constant 0 : i32
    %c0_i32_1 = arith.constant 0 : i32
    return %c0_i32, %c0_i32_0 : i32, i32
  }
  func.func @transform_5(%arg0: i32, %arg1: i32) -> (i32, i32) {
    %c0_i32 = arith.constant 0 : i32
    %c0_i32_0 = arith.constant 0 : i32
    return %arg0, %c0_i32 : i32, i32
  }
}

</mosaic_0001>

<llo_original>
// kernel: tpu_custom_call.1
$region0: #{tpu_custom_call.1}
  #allocation0 [shape = 'u32[]', space=smem, size = 0x4, offset = 0x4, fixed_abs, tag = 'smem constant byte address 0x4 - core index']
  #allocation1 [shape = 'u32[144,128]{1,0:T(1,128)}', space=vmem, size = 0x12000, scoped, tag = 'internal scratch']
  #allocation2 [shape = 'f32[16,32]{1,0:T(8,128)}', space=vmem, size = 0x2000, scoped, tag = 'scratch operand']
  %s0 = inlined_call_operand.vmem [shape: bf16[16,32], index: 0, kind: input, shape index: {}]
  %s1 = inlined_call_operand.vmem [shape: bf16[32,64], index: 1, kind: input, shape index: {}]
  %s2 = inlined_call_operand.vmem [shape: f32[1,64], index: 2, kind: input, shape index: {}]
  %s3 = inlined_call_operand.vmem [shape: bf16[64,32], index: 3, kind: input, shape index: {}]
  %s4 = inlined_call_operand.vmem [shape: f32[1,32], index: 4, kind: input, shape index: {}]
  %s5 = inlined_call_operand.hbm [shape: f32[16,32], index: 5, kind: output, shape index: {}]
  %s6 = sld [smem:[#allocation0]]
  $region38: #{tpu_custom_call.1} parent=0
    _
  %s8 = ssub.s32 1, %s6
  %s9 = scalar_select 0, %s8, %s6
  $region1: #{tpu_custom_call.1} parent=0
    #allocation3 [shape = 'u8[8192]{0}', space=vmem, size = 0x2000, scoped, tag = 'output window, operand 0, single buffered']
    #allocation4 [shape = 's32[1]{0}', space=sflag, size = 0x4, scoped, tag = 'scoped memory for tpu_custom_call.1']
    %10 = vsyncpa [#allocation4], 0
    // Predicated region
    $region2: #{tpu_custom_call.1} parent=1 // pred_check
      _
    $region3: #{tpu_custom_call.1} parent=1 // pred_check_branch
      %12 = sbr.rel (0) target = $region5
    $region4: #{tpu_custom_call.1} parent=1 // pred_region
      _
    $region5: #{tpu_custom_call.1} parent=1 // pred_fallthru
      _
    // Predicated region
    $region6: #{tpu_custom_call.1} parent=1 // pred_check
      _
    $region7: #{tpu_custom_call.1} parent=1 // pred_check_branch
      %14 = sbr.rel (0) target = $region9
    $region8: #{tpu_custom_call.1} parent=1 // pred_region
      _
    $region9: #{tpu_custom_call.1} parent=1 // pred_fallthru
      _
    // Predicated region
    $region10: #{tpu_custom_call.1} parent=1 // pred_check
      _
    $region11: #{tpu_custom_call.1} parent=1 // pred_check_branch
      %16 = sbr.rel (0) target = $region13
    $region12: #{tpu_custom_call.1} parent=1 // pred_region
      _
    $region13: #{tpu_custom_call.1} parent=1 // pred_fallthru
      _
    // Predicated region
    $region14: #{tpu_custom_call.1} parent=1 // pred_check
      _
    $region15: #{tpu_custom_call.1} parent=1 // pred_check_branch
      %18 = sbr.rel (0) target = $region17
    $region16: #{tpu_custom_call.1} parent=1 // pred_region
      _
    $region17: #{tpu_custom_call.1} parent=1 // pred_fallthru
      _
    // Predicated region
    $region18: #{tpu_custom_call.1} parent=1 // pred_check
      _
    $region19: #{tpu_custom_call.1} parent=1 // pred_check_branch
      %20 = sbr.rel (0) target = $region21
    $region20: #{tpu_custom_call.1} parent=1 // pred_region
      _
    $region21: #{tpu_custom_call.1} parent=1 // pred_fallthru
      _
    %p22 = scmp.eq.s32.totalorder 0, 0
    // Predicated region
    $region22: #{tpu_custom_call.1} parent=1 // pred_check
      %p23 = pneg %p22
    $region23: #{tpu_custom_call.1} parent=1 // pred_check_branch
      %25 = sbr.rel (%p23) target = $region25
    $region24: #{tpu_custom_call.1} parent=1 // pred_region
      %vm26 = vcmask 261120
      %27 = vst.msk [vmem:[#allocation2] sm:$0xff] %vm26, 0.0
      %28 = vst.msk [vmem:[#allocation2 + $0x8] sm:$0xff] %vm26, 0.0
    $region25: #{tpu_custom_call.1} parent=1 // pred_fallthru
      _
    %v29 = vld [vmem:[%s0] sm:$0xf]
    %v30 = vld [vmem:[%s0 + $0x4] sm:$0xf]
    %v31 = vld [vmem:[%s1] sm:$0xf]
    %v32 = vld [vmem:[%s1 + $0x4] sm:$0xf]
    %v33 = vld [vmem:[%s1 + $0x8] sm:$0xf]
    %v34 = vld [vmem:[%s1 + $0xc] sm:$0xf]
    %v35 = vld [vmem:[%s2] sm:$0x1]
    %v37 = vlaneseq
    %v38 = vshrl.u32 %v37, 7
    %v39 = vsub.s32 0, %v38
    %v40 = vrot.slane %v35, %v39
    %v44 = vunpack.c.l.b16 %v29
    %v45 = vunpack.c.l.b16 %v30
    %v46 = vpack.c.b16 %v45, %v44
    %v51 = vunpack.c.l.b16 %v31
    %v52 = vunpack.c.l.b16 %v32
    %v53 = vunpack.c.l.b16 %v33
    %v54 = vunpack.c.l.b16 %v34
    %v55 = vpack.c.b16 %v52, %v51
    %v56 = vpack.c.b16 %v54, %v53
    %vm59 = vcmask 261120
    %v61 = vsel %vm59, %v46, 0
    %63 = vmatprep.subr.bf16.mxu0 0
    %64 = vmatpush1.bf16.msra.mxu0 %v55
    %65 = vmatprep.subr.bf16.mxu0 0
    %66 = vmatpush1.bf16.msra.mxu0 %v56
    %67 = vmatprep.subr.bf16.mxu0 0
    %68 = vmatpush1.bf16.msra.mxu0 0
    %69 = vmatprep.subr.bf16.mxu0 0
    %70 = vmatpush1.bf16.msra.mxu0 0
    %71 = vmatprep.subr.bf16.mxu0 0
    %72 = vmatpush1.bf16.msra.mxu0 0
    %73 = vmatprep.subr.bf16.mxu0 0
    %74 = vmatpush1.bf16.msra.mxu0 0
    %75 = vmatprep.subr.bf16.mxu0 0
    %76 = vmatpush1.bf16.msra.mxu0 0
    %77 = vmatprep.subr.bf16.mxu0 0
    %78 = vmatpush1.bf16.msra.mxu0 0
    %79 = vmatprep.subr.bf16.mxu0 0
    %80 = vmatpush1.bf16.msra.mxu0 0
    %81 = vmatprep.subr.bf16.mxu0 0
    %82 = vmatpush1.bf16.msra.mxu0 0
    %83 = vmatprep.subr.bf16.mxu0 0
    %84 = vmatpush1.bf16.msra.mxu0 0
    %85 = vmatprep.subr.bf16.mxu0 0
    %86 = vmatpush1.bf16.msra.mxu0 0
    %87 = vmatprep.subr.bf16.mxu0 0
    %88 = vmatpush1.bf16.msra.mxu0 0
    %89 = vmatprep.subr.bf16.mxu0 0
    %90 = vmatpush1.bf16.msra.mxu0 0
    %91 = vmatprep.subr.bf16.mxu0 0
    %92 = vmatpush1.bf16.msra.mxu0 0
    %93 = vmatprep.subr.bf16.mxu0 0
    %94 = vmatpush1.bf16.msra.mxu0 0
    %95 = vmatprep.mubr.bf16.mxu0 0
    %96 = vmatmul.mubr.bf16.gmra.mrb[0].mxu0 %v61
    %v97 = vpop.f32.mrb[0].mxu0
    %v98 = vadd.f32 %v40, %v97
    %v99 = vpop.f32.mrb[0].mxu0
    %v100 = vpop.f32.mrb[0].mxu0
    %v101 = vadd.f32 %v40, %v100
    %v102 = vpop.f32.mrb[0].mxu0
    %103 = vdwg.mxu0
    %v104 = vmul.f32 %v98, 0.5
    %v105 = vmul.f32 %v101, 0.5
    %v106 = vmul.f32 %v98, 0.70710677
    %v107 = vmul.f32 %v101, 0.70710677
    %v108 = verf.f32.pop %v106
    %v109 = verf.f32.pop %v107
    %v110 = vadd.f32 %v108, 1.0
    %v111 = vadd.f32 %v109, 1.0
    %v112 = vmul.f32 %v104, %v110
    %v113 = vmul.f32 %v105, %v111
    %v114 = vld [vmem:[#allocation2] sm:$0xff]
    %v115 = vld [vmem:[#allocation2 + $0x8] sm:$0xff]
    %v116 = vpack.c.bf16 %v113, %v112
    %v117 = vld [vmem:[%s3] sm:$0xf]
    %v118 = vld [vmem:[%s3 + $0x4] sm:$0xf]
    %v119 = vld [vmem:[%s3 + $0x8] sm:$0xf]
    %v120 = vld [vmem:[%s3 + $0xc] sm:$0xf]
    %v121 = vld [vmem:[%s3 + $0x10] sm:$0xf]
    %v122 = vld [vmem:[%s3 + $0x14] sm:$0xf]
    %v123 = vld [vmem:[%s3 + $0x18] sm:$0xf]
    %v124 = vld [vmem:[%s3 + $0x1c] sm:$0xf]
    %v133 = vunpack.c.l.b16 %v117
    %v134 = vunpack.c.l.b16 %v118
    %v135 = vunpack.c.l.b16 %v119
    %v136 = vunpack.c.l.b16 %v120
    %v137 = vunpack.c.l.b16 %v121
    %v138 = vunpack.c.l.b16 %v122
    %v139 = vunpack.c.l.b16 %v123
    %v140 = vunpack.c.l.b16 %v124
    %v141 = vpack.c.b16 %v134, %v133
    %v142 = vpack.c.b16 %v136, %v135
    %v143 = vpack.c.b16 %v138, %v137
    %v144 = vpack.c.b16 %v140, %v139
    %vm149 = vcmask 523264
    %v151 = vsel %vm149, %v116, 0
    %153 = vmatprep.subr.bf16.mxu0 0
    %154 = vmatpush1.bf16.msra.mxu0 %v141
    %155 = vmatprep.subr.bf16.mxu0 0
    %156 = vmatpush1.bf16.msra.mxu0 %v142
    %157 = vmatprep.subr.bf16.mxu0 0
    %158 = vmatpush1.bf16.msra.mxu0 %v143
    %159 = vmatprep.subr.bf16.mxu0 0
    %160 = vmatpush1.bf16.msra.mxu0 %v144
    %161 = vmatprep.subr.bf16.mxu0 0
    %162 = vmatpush1.bf16.msra.mxu0 0
    %163 = vmatprep.subr.bf16.mxu0 0
    %164 = vmatpush1.bf16.msra.mxu0 0
    %165 = vmatprep.subr.bf16.mxu0 0
    %166 = vmatpush1.bf16.msra.mxu0 0
    %167 = vmatprep.subr.bf16.mxu0 0
    %168 = vmatpush1.bf16.msra.mxu0 0
    %169 = vmatprep.subr.bf16.mxu0 0
    %170 = vmatpush1.bf16.msra.mxu0 0
    %171 = vmatprep.subr.bf16.mxu0 0
    %172 = vmatpush1.bf16.msra.mxu0 0
    %173 = vmatprep.subr.bf16.mxu0 0
    %174 = vmatpush1.bf16.msra.mxu0 0
    %175 = vmatprep.subr.bf16.mxu0 0
    %176 = vmatpush1.bf16.msra.mxu0 0
    %177 = vmatprep.subr.bf16.mxu0 0
    %178 = vmatpush1.bf16.msra.mxu0 0
    %179 = vmatprep.subr.bf16.mxu0 0
    %180 = vmatpush1.bf16.msra.mxu0 0
    %181 = vmatprep.subr.bf16.mxu0 0
    %182 = vmatpush1.bf16.msra.mxu0 0
    %183 = vmatprep.subr.bf16.mxu0 0
    %184 = vmatpush1.bf16.msra.mxu0 0
    %185 = vmatprep.mubr.bf16.mxu0 0
    %186 = vmatmul.mubr.bf16.gmra.mrb[0].mxu0 %v151
    %v187 = vpop.f32.mrb[0].mxu0
    %v188 = vadd.f32 0.0, %v187
    %v189 = vpop.f32.mrb[0].mxu0
    %v190 = vpop.f32.mrb[0].mxu0
    %v191 = vadd.f32 0.0, %v190
    %v192 = vpop.f32.mrb[0].mxu0
    %193 = vdwg.mxu0
    %v194 = vadd.f32 %v114, %v188
    %v195 = vadd.f32 %v115, %v191
    %196 = vst.msk [vmem:[#allocation2] sm:$0xff] %vm59, %v194
    %197 = vst.msk [vmem:[#allocation2 + $0x8] sm:$0xff] %vm59, %v195
    // Predicated region
    $region26: #{tpu_custom_call.1} parent=1 // pred_check
      %p198 = pneg %p22
    $region27: #{tpu_custom_call.1} parent=1 // pred_check_branch
      %200 = sbr.rel (%p198) target = $region29
    $region28: #{tpu_custom_call.1} parent=1 // pred_region
      %v201 = vld [vmem:[#allocation2] sm:$0xff]
      %v202 = vld [vmem:[#allocation2 + $0x8] sm:$0xff]
      %v203 = vld [vmem:[%s4] sm:$0x1]
      %v205 = vlaneseq
      %v206 = vshrl.u32 %v205, 7
      %v207 = vsub.s32 0, %v206
      %v208 = vrot.slane %v203, %v207
      %v210 = vadd.f32 %v201, %v208
      %v211 = vadd.f32 %v202, %v208
      %212 = vst.msk [vmem:[#allocation3] sm:$0xff] %vm59, %v210
      %213 = vst.msk [vmem:[#allocation3 + $0x8] sm:$0xff] %vm59, %v211
    $region29: #{tpu_custom_call.1} parent=1 // pred_fallthru
      _
    // Predicated region
    $region30: #{tpu_custom_call.1} parent=1 // pred_check
      _
    $region31: #{tpu_custom_call.1} parent=1 // pred_check_branch
      %215 = sbr.rel (0) target = $region33
    $region32: #{tpu_custom_call.1} parent=1 // pred_region
      %s217 = ssub.s32 256, 256
      %218 = vsyncadd [#allocation4], %s217
      %s219 = sshll.u32 [#allocation3], 4
      %s220 = int_to_ptr.vmem [resolvable:$true] %s219
      %225 = dma.vmem_to_hbm [thread:$0]  %s220, 256, %s5, [#allocation4], 128, 128, 8
    $region33: #{tpu_custom_call.1} parent=1 // pred_fallthru
      _
    // Predicated region
    $region34: #{tpu_custom_call.1} parent=1 // pred_check
      _
    $region35: #{tpu_custom_call.1} parent=1 // pred_check_branch
      %227 = sbr.rel (0) target = $region37
    $region36: #{tpu_custom_call.1} parent=1 // pred_region
      %228 = dma.done [#allocation4], 256
    $region37: #{tpu_custom_call.1} parent=1 // pred_fallthru
      _
    %229 = vsyncpa [#allocation4], 1

</llo_original>
